<compile_context>
chip_gen: v7x
topology: tpu7x:2x2x1
jax: 0.10.0
libtpu: 0.0.40
codegen_flags: <defaults>
</compile_context>

<pallas_src>
import functools

import jax
import jax.numpy as jnp
from jax.experimental import pallas as pl
from jax.experimental.pallas import tpu as pltpu


def _conv_relu_maxpool_kernel(p_ref, w_ref, b_ref, o_ref, *, L):
    # p_ref: (K*K*Cin, 4*L)   im2col patches, columns = (pool_offset, n, oy, ox)
    # w_ref: (Cout, K*K*Cin)  reshaped conv weights
    # b_ref: (Cout, 1)        bias
    # o_ref: (Cout, L)        pooled output, columns = (n, oy, ox)
    s = jnp.dot(w_ref[...], p_ref[...],
                preferred_element_type=jnp.float32)          # (Cout, 4*L)  one MXU pass group
    s = jnp.maximum(s + b_ref[...], 0.0)                     # bias + ReLU applied once
    pooled = jnp.maximum(                                    # 2x2 max-pool over offset blocks
        jnp.maximum(s[:, 0 * L:1 * L], s[:, 1 * L:2 * L]),
        jnp.maximum(s[:, 2 * L:3 * L], s[:, 3 * L:4 * L]),
    )
    o_ref[...] = pooled.astype(o_ref.dtype)


def conv_layer_forward(x_nchw, w_oihw, b, *, stride=1, padding=1,
                       pool_kernel_size=2, pool_stride=2):
    """Conv2d(stride, padding) -> ReLU -> MaxPool2d(2, 2), matching CONV_LAYER(max_pooling=True)."""
    # TODO(synk): AvgPool2d branch (max_pooling=False) not implemented.
    assert pool_kernel_size == 2 and pool_stride == 2, "kernel assumes 2x2/2 max pool"
    N, Cin, H, W = x_nchw.shape
    Cout, Cin_w, K, K2 = w_oihw.shape
    assert Cin_w == Cin and K == K2

    Hc = (H + 2 * padding - K) // stride + 1                  # conv output size
    Wc = (W + 2 * padding - K) // stride + 1
    Ho, Wo = Hc // 2, Wc // 2                                 # pooled output size (floor)
    L = N * Ho * Wo
    KKC = K * K * Cin

    # ---- plain-JAX glue: layout change, zero-pad, im2col, pool-parity grouping ----
    x_nhwc = jnp.transpose(x_nchw, (0, 2, 3, 1)).astype(jnp.float32)
    xpad = jnp.pad(x_nhwc, ((0, 0), (padding, padding), (padding, padding), (0, 0)))

    cols = []
    for kh in range(K):
        for kw in range(K):
            cols.append(xpad[:,
                             kh:kh + (Hc - 1) * stride + 1:stride,
                             kw:kw + (Wc - 1) * stride + 1:stride,
                             :])                               # (N, Hc, Wc, Cin)
    patches = jnp.concatenate(cols, axis=-1)                   # (N, Hc, Wc, K*K*Cin)
    patches = patches[:, :2 * Ho, :2 * Wo, :]                  # pool floor behaviour
    patches = patches.reshape(N, Ho, 2, Wo, 2, KKC)
    # -> (dy, dx, n, oy, ox, kkc) -> rows (offset, n, oy, ox)
    patches = jnp.transpose(patches, (2, 4, 0, 1, 3, 5)).reshape(4 * L, KKC)
    p_t = patches.T                                            # (KKC, 4*L)  lane-dense columns

    # weight feature order must match patch feature order: (kh, kw, cin)
    w_mat = jnp.transpose(w_oihw, (0, 2, 3, 1)).reshape(Cout, KKC).astype(jnp.float32)
    b2 = b.reshape(Cout, 1).astype(jnp.float32)

    kernel = functools.partial(_conv_relu_maxpool_kernel, L=L)
    out = pl.pallas_call(
        kernel,
        out_shape=jax.ShapeDtypeStruct((Cout, L), jnp.float32),
        grid=(1,),                                             # single step: whole problem at once
        in_specs=[
            pl.BlockSpec((KKC, 4 * L), lambda i: (0, 0)),
            pl.BlockSpec((Cout, KKC), lambda i: (0, 0)),
            pl.BlockSpec((Cout, 1), lambda i: (0, 0)),
        ],
        out_specs=pl.BlockSpec((Cout, L), lambda i: (0, 0)),
        compiler_params=pltpu.CompilerParams(dimension_semantics=("arbitrary",)),
    )(p_t, w_mat, b2)

    # (Cout, N*Ho*Wo) -> NCHW
    out = out.reshape(Cout, N, Ho, Wo)
    return jnp.transpose(out, (1, 0, 2, 3))


if __name__ == "__main__":
    key = jax.random.PRNGKey(0)
    k1, k2, k3 = jax.random.split(key, 3)

    # CONV_LAYER(in_channels=4, out_channels=8, kernel_size=3, stride=1, padding=1)
    N, Cin, H, W = 2, 4, 16, 16
    Cout, K = 8, 3
    x = jax.random.normal(k1, (N, Cin, H, W), jnp.float32)
    w = jax.random.normal(k2, (Cout, Cin, K, K), jnp.float32) * 0.1
    b = jax.random.normal(k3, (Cout,), jnp.float32) * 0.1

    out = jax.block_until_ready(conv_layer_forward(x, w, b))

    # pure-JAX reference: Conv2d -> ReLU -> MaxPool2d(2, 2)
    conv = jax.lax.conv_general_dilated(
        x, w, window_strides=(1, 1), padding=((1, 1), (1, 1)),
        dimension_numbers=("NCHW", "OIHW", "NCHW"))
    conv = jnp.maximum(conv + b[None, :, None, None], 0.0)
    ref = jax.lax.reduce_window(conv, -jnp.inf, jax.lax.max,
                                (1, 1, 2, 2), (1, 1, 2, 2), "VALID")

    assert out.shape == (N, Cout, H // 2, W // 2)
    assert jnp.allclose(out, ref, atol=1e-4, rtol=1e-4)
    print("KERNEL_OK")
</pallas_src>

<mosaic_0001>
module attributes {stable_mosaic.version = 11 : i64} {
  func.func @_conv_relu_maxpool_kernel(%arg0: i32, %arg1: memref<36x512xf32, #tpu.memory_space<vmem>>, %arg2: memref<8x36xf32, #tpu.memory_space<vmem>>, %arg3: memref<8x1xf32, #tpu.memory_space<vmem>>, %arg4: memref<8x128xf32, #tpu.memory_space<vmem>>) attributes {dimension_semantics = [#tpu.dimension_semantics<arbitrary>], iteration_bounds = array<i64: 1>, scalar_prefetch = 0 : i64, scratch_operands = 0 : i64, tpu.core_type = #tpu.core_type<tc>, window_params = [{pipeline_mode = #tpu.pipeline_mode<synchronous>, transform_indices = @transform_0, window_bounds = array<i64: 36, 512>}, {pipeline_mode = #tpu.pipeline_mode<synchronous>, transform_indices = @transform_1, window_bounds = array<i64: 8, 36>}, {pipeline_mode = #tpu.pipeline_mode<synchronous>, transform_indices = @transform_2, window_bounds = array<i64: 8, 1>}, {pipeline_mode = #tpu.pipeline_mode<synchronous>, transform_indices = @transform_3, window_bounds = array<i64: 8, 128>}]} {
    %c0 = arith.constant 0 : index
    %c0_0 = arith.constant 0 : index
    %0 = vector.load %arg2[%c0, %c0_0] : memref<8x36xf32, #tpu.memory_space<vmem>>, vector<8x36xf32>
    %c0_1 = arith.constant 0 : index
    %c0_2 = arith.constant 0 : index
    %1 = vector.load %arg1[%c0_1, %c0_2] : memref<36x512xf32, #tpu.memory_space<vmem>>, vector<36x512xf32>
    %cst = arith.constant dense<0.000000e+00> : vector<8x512xf32>
    %2 = tpu.matmul %0, %1, %cst {dimension_numbers = #tpu.dot_dimension_numbers<[1], [0], [0], [1], [0, 0, 1, 1], [], []>} : vector<8x36xf32>, vector<36x512xf32>, vector<8x512xf32> -> vector<8x512xf32>
    %c0_3 = arith.constant 0 : index
    %c0_4 = arith.constant 0 : index
    %3 = vector.load %arg3[%c0_3, %c0_4] : memref<8x1xf32, #tpu.memory_space<vmem>>, vector<8x1xf32>
    %4 = vector.broadcast %3 : vector<8x1xf32> to vector<8x512xf32>
    %5 = arith.addf %2, %4 : vector<8x512xf32>
    %cst_5 = arith.constant 0.000000e+00 : f32
    %6 = vector.broadcast %cst_5 : f32 to vector<8x512xf32>
    %7 = arith.maximumf %5, %6 : vector<8x512xf32>
    %8 = vector.extract_strided_slice %7 {offsets = [0, 0], sizes = [8, 128], strides = [1, 1]} : vector<8x512xf32> to vector<8x128xf32>
    %9 = vector.extract_strided_slice %7 {offsets = [0, 128], sizes = [8, 128], strides = [1, 1]} : vector<8x512xf32> to vector<8x128xf32>
    %10 = arith.maximumf %8, %9 : vector<8x128xf32>
    %11 = vector.extract_strided_slice %7 {offsets = [0, 256], sizes = [8, 128], strides = [1, 1]} : vector<8x512xf32> to vector<8x128xf32>
    %12 = vector.extract_strided_slice %7 {offsets = [0, 384], sizes = [8, 128], strides = [1, 1]} : vector<8x512xf32> to vector<8x128xf32>
    %13 = arith.maximumf %11, %12 : vector<8x128xf32>
    %14 = arith.maximumf %10, %13 : vector<8x128xf32>
    %c0_6 = arith.constant 0 : index
    %c0_7 = arith.constant 0 : index
    %15 = vector.load %arg4[%c0_6, %c0_7] : memref<8x128xf32, #tpu.memory_space<vmem>>, vector<8x128xf32>
    tpu.vector_store %arg4[%c0_6, %c0_7], %14 {strides = array<i32>} : memref<8x128xf32, #tpu.memory_space<vmem>>, vector<8x128xf32>,
    return
  }
  func.func @transform_0(%arg0: i32) -> (i32, i32) {
    %c0_i32 = arith.constant 0 : i32
    %c0_i32_0 = arith.constant 0 : i32
    %c0_i32_1 = arith.constant 0 : i32
    return %c0_i32, %c0_i32_0 : i32, i32
  }
  func.func @transform_1(%arg0: i32) -> (i32, i32) {
    %c0_i32 = arith.constant 0 : i32
    %c0_i32_0 = arith.constant 0 : i32
    %c0_i32_1 = arith.constant 0 : i32
    return %c0_i32, %c0_i32_0 : i32, i32
  }
  func.func @transform_2(%arg0: i32) -> (i32, i32) {
    %c0_i32 = arith.constant 0 : i32
    %c0_i32_0 = arith.constant 0 : i32
    %c0_i32_1 = arith.constant 0 : i32
    return %c0_i32, %c0_i32_0 : i32, i32
  }
  func.func @transform_3(%arg0: i32) -> (i32, i32) {
    %c0_i32 = arith.constant 0 : i32
    %c0_i32_0 = arith.constant 0 : i32
    %c0_i32_1 = arith.constant 0 : i32
    return %c0_i32, %c0_i32_0 : i32, i32
  }
}

</mosaic_0001>

<llo_original>
// kernel: tpu_custom_call.1
$region0: #{tpu_custom_call.1}
  #allocation0 [shape = 'u32[]', space=smem, size = 0x4, offset = 0x4, fixed_abs, tag = 'smem constant byte address 0x4 - core index']
  #allocation1 [shape = 'u32[144,128]{1,0:T(1,128)}', space=vmem, size = 0x12000, scoped, tag = 'internal scratch']
  %s0 = inlined_call_operand.hbm [shape: f32[36,512], index: 0, kind: input, shape index: {}]
  %s1 = inlined_call_operand.vmem [shape: f32[8,36], index: 1, kind: input, shape index: {}]
  %s2 = inlined_call_operand.vmem [shape: f32[8,1], index: 2, kind: input, shape index: {}]
  %s3 = inlined_call_operand.hbm [shape: f32[8,128], index: 3, kind: output, shape index: {}]
  %s4 = sld [smem:[#allocation0]]
  $region26: #{tpu_custom_call.1} parent=0
    _
  %s6 = ssub.s32 1, %s4
  %s7 = scalar_select 0, %s6, %s4
  $region1: #{tpu_custom_call.1} parent=0
    #allocation2 [shape = 'u8[81920]{0}', space=vmem, size = 0x14000, scoped, tag = 'input window, operand 0, single buffered']
    #allocation3 [shape = 's32[1]{0}', space=sflag, size = 0x4, scoped, tag = 'scoped memory for tpu_custom_call.1']
    #allocation4 [shape = 's32[1]{0}', space=sflag, size = 0x4, scoped, tag = 'scoped memory for tpu_custom_call.1']
    #allocation5 [shape = 'u8[4096]{0}', space=vmem, size = 0x1000, scoped, tag = 'output window, operand 0, single buffered']
    %8 = vsyncpa [#allocation3], 0
    %9 = vsyncpa [#allocation4], 0
    // Predicated region
    $region2: #{tpu_custom_call.1} parent=1 // pred_check
      _
    $region3: #{tpu_custom_call.1} parent=1 // pred_check_branch
      %11 = sbr.rel (0) target = $region5
    $region4: #{tpu_custom_call.1} parent=1 // pred_region
      %s13 = ssub.s32 2560, 2560
      %14 = vsyncadd [#allocation3], %s13
      %s15 = sshll.u32 [#allocation2], 4
      %s16 = int_to_ptr.vmem [resolvable:$true] %s15
      %21 = dma.hbm_to_vmem [thread:$0]  %s0, 2560, %s16, [#allocation3], 512, 512, 32
    $region5: #{tpu_custom_call.1} parent=1 // pred_fallthru
      _
    // Predicated region
    $region6: #{tpu_custom_call.1} parent=1 // pred_check
      _
    $region7: #{tpu_custom_call.1} parent=1 // pred_check_branch
      %23 = sbr.rel (0) target = $region9
    $region8: #{tpu_custom_call.1} parent=1 // pred_region
      _
    $region9: #{tpu_custom_call.1} parent=1 // pred_fallthru
      _
    // Predicated region
    $region10: #{tpu_custom_call.1} parent=1 // pred_check
      _
    $region11: #{tpu_custom_call.1} parent=1 // pred_check_branch
      %25 = sbr.rel (0) target = $region13
    $region12: #{tpu_custom_call.1} parent=1 // pred_region
      _
    $region13: #{tpu_custom_call.1} parent=1 // pred_fallthru
      _
    // Predicated region
    $region14: #{tpu_custom_call.1} parent=1 // pred_check
      _
    $region15: #{tpu_custom_call.1} parent=1 // pred_check_branch
      %27 = sbr.rel (0) target = $region17
    $region16: #{tpu_custom_call.1} parent=1 // pred_region
      %28 = dma.done [#allocation3], 2560
    $region17: #{tpu_custom_call.1} parent=1 // pred_fallthru
      _
    %v29 = vld [vmem:[%s1] sm:$0xff]
    %v30 = vld [vmem:[#allocation2] sm:$0xff]
    %v31 = vld [vmem:[#allocation2 + $0x8] sm:$0xff]
    %v32 = vld [vmem:[#allocation2 + $0x10] sm:$0xff]
    %v33 = vld [vmem:[#allocation2 + $0x18] sm:$0xff]
    %v34 = vld [vmem:[#allocation2 + $0x20] sm:$0xff]
    %v35 = vld [vmem:[#allocation2 + $0x28] sm:$0xff]
    %v36 = vld [vmem:[#allocation2 + $0x30] sm:$0xff]
    %v37 = vld [vmem:[#allocation2 + $0x38] sm:$0xff]
    %v38 = vld [vmem:[#allocation2 + $0x40] sm:$0xff]
    %v39 = vld [vmem:[#allocation2 + $0x48] sm:$0xff]
    %v40 = vld [vmem:[#allocation2 + $0x50] sm:$0xff]
    %v41 = vld [vmem:[#allocation2 + $0x58] sm:$0xff]
    %v42 = vld [vmem:[#allocation2 + $0x60] sm:$0xff]
    %v43 = vld [vmem:[#allocation2 + $0x68] sm:$0xff]
    %v44 = vld [vmem:[#allocation2 + $0x70] sm:$0xff]
    %v45 = vld [vmem:[#allocation2 + $0x78] sm:$0xff]
    %v46 = vld [vmem:[#allocation2 + $0x80] sm:$0xf]
    %v47 = vld [vmem:[#allocation2 + $0x88] sm:$0xf]
    %v48 = vld [vmem:[#allocation2 + $0x90] sm:$0xf]
    %v49 = vld [vmem:[#allocation2 + $0x98] sm:$0xf]
    %v50 = vld [vmem:[%s2] sm:$0xff]
    %52 = vset.pattern.permute.xlu0 0
    %53 = vperm.xlu0 %52, %v50
    %v54 = vpop.permute.xlu0 %53
    %vm56 = vcmask 293888
    %v58 = vsel %vm56, %v29, 0
    %vm60 = vcmask 1043456
    %v62 = vsel %vm60, %v46, 0
    %v65 = vsel %vm60, %v47, 0
    %v68 = vsel %vm60, %v48, 0
    %v71 = vsel %vm60, %v49, 0
    %73 = vmatprep.subr.mxu0 %v31
    %74 = vmatpush1.msra.mxu0 %v30
    %75 = vmatprep.subr.mxu0 %v35
    %76 = vmatpush1.msra.mxu0 %v34
    %77 = vmatprep.subr.mxu0 %v39
    %78 = vmatpush1.msra.mxu0 %v38
    %79 = vmatprep.subr.mxu0 %v43
    %80 = vmatpush1.msra.mxu0 %v42
    %81 = vmatprep.subr.mxu0 %v65
    %82 = vmatpush1.msra.mxu0 %v62
    %83 = vmatprep.subr.mxu0 0.0
    %84 = vmatpush1.msra.mxu0 0.0
    %85 = vmatprep.subr.mxu0 0.0
    %86 = vmatpush1.msra.mxu0 0.0
    %87 = vmatprep.subr.mxu0 0.0
    %88 = vmatpush1.msra.mxu0 0.0
    %89 = vmatprep.subr.mxu0 0.0
    %90 = vmatpush1.msra.mxu0 0.0
    %91 = vmatprep.subr.mxu0 0.0
    %92 = vmatpush1.msra.mxu0 0.0
    %93 = vmatprep.subr.mxu0 0.0
    %94 = vmatpush1.msra.mxu0 0.0
    %95 = vmatprep.subr.mxu0 0.0
    %96 = vmatpush1.msra.mxu0 0.0
    %97 = vmatprep.subr.mxu0 0.0
    %98 = vmatpush1.msra.mxu0 0.0
    %99 = vmatprep.subr.mxu0 0.0
    %100 = vmatpush1.msra.mxu0 0.0
    %101 = vmatprep.subr.mxu0 0.0
    %102 = vmatpush1.msra.mxu0 0.0
    %103 = vmatprep.subr.mxu0 0.0
    %104 = vmatpush1.msra.mxu0 0.0
    %105 = vmatprep.subr.mxu0 0.0
    %106 = vmatpush1.msra.mxu0 0.0
    %107 = vmatprep.subr.mxu0 0.0
    %108 = vmatpush1.msra.mxu0 0.0
    %109 = vmatprep.subr.mxu0 0.0
    %110 = vmatpush1.msra.mxu0 0.0
    %111 = vmatprep.subr.mxu0 0.0
    %112 = vmatpush1.msra.mxu0 0.0
    %113 = vmatprep.subr.mxu0 0.0
    %114 = vmatpush1.msra.mxu0 0.0
    %115 = vmatprep.subr.mxu0 0.0
    %116 = vmatpush1.msra.mxu0 0.0
    %117 = vmatprep.subr.mxu0 0.0
    %118 = vmatpush1.msra.mxu0 0.0
    %119 = vmatprep.subr.mxu0 0.0
    %120 = vmatpush1.msra.mxu0 0.0
    %121 = vmatprep.subr.mxu0 0.0
    %122 = vmatpush1.msra.mxu0 0.0
    %123 = vmatprep.subr.mxu0 0.0
    %124 = vmatpush1.msra.mxu0 0.0
    %125 = vmatprep.subr.mxu0 0.0
    %126 = vmatpush1.msra.mxu0 0.0
    %127 = vmatprep.subr.mxu0 0.0
    %128 = vmatpush1.msra.mxu0 0.0
    %129 = vmatprep.subr.mxu0 0.0
    %130 = vmatpush1.msra.mxu0 0.0
    %131 = vmatprep.subr.mxu0 0.0
    %132 = vmatpush1.msra.mxu0 0.0
    %133 = vmatprep.subr.mxu0 0.0
    %134 = vmatpush1.msra.mxu0 0.0
    %135 = vmatprep.subr.mxu0 0.0
    %136 = vmatpush1.msra.mxu0 0.0
    %137 = vmatprep.mubr.f32.mxu0 0.0
    %138 = vmatmul.mubr.f32.gmra.mrb[0].mxu0 %v58
    %v139 = vpop.f32.mrb[0].mxu0
    %v140 = vadd.f32 %v54, %v139
    %v141 = vpop.f32.mrb[0].mxu0
    %v142 = vadd.f32 %v54, %v141
    %143 = vdwg.mxu0
    %144 = vmatprep.subr.mxu0 %v33
    %145 = vmatpush1.msra.mxu0 %v32
    %146 = vmatprep.subr.mxu0 %v37
    %147 = vmatpush1.msra.mxu0 %v36
    %148 = vmatprep.subr.mxu0 %v41
    %149 = vmatpush1.msra.mxu0 %v40
    %150 = vmatprep.subr.mxu0 %v45
    %151 = vmatpush1.msra.mxu0 %v44
    %152 = vmatprep.subr.mxu0 %v71
    %153 = vmatpush1.msra.mxu0 %v68
    %154 = vmatprep.subr.mxu0 0.0
    %155 = vmatpush1.msra.mxu0 0.0
    %156 = vmatprep.subr.mxu0 0.0
    %157 = vmatpush1.msra.mxu0 0.0
    %158 = vmatprep.subr.mxu0 0.0
    %159 = vmatpush1.msra.mxu0 0.0
    %160 = vmatprep.subr.mxu0 0.0
    %161 = vmatpush1.msra.mxu0 0.0
    %162 = vmatprep.subr.mxu0 0.0
    %163 = vmatpush1.msra.mxu0 0.0
    %164 = vmatprep.subr.mxu0 0.0
    %165 = vmatpush1.msra.mxu0 0.0
    %166 = vmatprep.subr.mxu0 0.0
    %167 = vmatpush1.msra.mxu0 0.0
    %168 = vmatprep.subr.mxu0 0.0
    %169 = vmatpush1.msra.mxu0 0.0
    %170 = vmatprep.subr.mxu0 0.0
    %171 = vmatpush1.msra.mxu0 0.0
    %172 = vmatprep.subr.mxu0 0.0
    %173 = vmatpush1.msra.mxu0 0.0
    %174 = vmatprep.subr.mxu0 0.0
    %175 = vmatpush1.msra.mxu0 0.0
    %176 = vmatprep.subr.mxu0 0.0
    %177 = vmatpush1.msra.mxu0 0.0
    %178 = vmatprep.subr.mxu0 0.0
    %179 = vmatpush1.msra.mxu0 0.0
    %180 = vmatprep.subr.mxu0 0.0
    %181 = vmatpush1.msra.mxu0 0.0
    %182 = vmatprep.subr.mxu0 0.0
    %183 = vmatpush1.msra.mxu0 0.0
    %184 = vmatprep.subr.mxu0 0.0
    %185 = vmatpush1.msra.mxu0 0.0
    %186 = vmatprep.subr.mxu0 0.0
    %187 = vmatpush1.msra.mxu0 0.0
    %188 = vmatprep.subr.mxu0 0.0
    %189 = vmatpush1.msra.mxu0 0.0
    %190 = vmatprep.subr.mxu0 0.0
    %191 = vmatpush1.msra.mxu0 0.0
    %192 = vmatprep.subr.mxu0 0.0
    %193 = vmatpush1.msra.mxu0 0.0
    %194 = vmatprep.subr.mxu0 0.0
    %195 = vmatpush1.msra.mxu0 0.0
    %196 = vmatprep.subr.mxu0 0.0
    %197 = vmatpush1.msra.mxu0 0.0
    %198 = vmatprep.subr.mxu0 0.0
    %199 = vmatpush1.msra.mxu0 0.0
    %200 = vmatprep.subr.mxu0 0.0
    %201 = vmatpush1.msra.mxu0 0.0
    %202 = vmatprep.subr.mxu0 0.0
    %203 = vmatpush1.msra.mxu0 0.0
    %204 = vmatprep.subr.mxu0 0.0
    %205 = vmatpush1.msra.mxu0 0.0
    %206 = vmatprep.subr.mxu0 0.0
    %207 = vmatpush1.msra.mxu0 0.0
    %208 = vmatprep.mubr.f32.mxu0 0.0
    %209 = vmatmul.mubr.f32.gmra.mrb[0].mxu0 %v58
    %v210 = vpop.f32.mrb[0].mxu0
    %v211 = vadd.f32 %v54, %v210
    %v212 = vpop.f32.mrb[0].mxu0
    %v213 = vadd.f32 %v54, %v212
    %214 = vdwg.mxu0
    %v215 = vmax.f32 %v140, 0.0
    %v216 = vmax.f32 %v142, 0.0
    %v217 = vmax.f32 %v211, 0.0
    %v218 = vmax.f32 %v213, 0.0
    %v219 = vmax.f32 %v215, %v216
    %v220 = vmax.f32 %v217, %v218
    %v221 = vmax.f32 %v219, %v220
    %222 = vst [vmem:[#allocation5] sm:$0xff] %v221
    // Predicated region
    $region18: #{tpu_custom_call.1} parent=1 // pred_check
      _
    $region19: #{tpu_custom_call.1} parent=1 // pred_check_branch
      %224 = sbr.rel (0) target = $region21
    $region20: #{tpu_custom_call.1} parent=1 // pred_region
      %s226 = ssub.s32 128, 128
      %227 = vsyncadd [#allocation4], %s226
      %s229 = sshll.u32 [#allocation5], 4
      %s230 = int_to_ptr.vmem [resolvable:$true] %s229
      %232 = dma.vmem_to_hbm [thread:$0]  %s230, 128, %s3, [#allocation4]
    $region21: #{tpu_custom_call.1} parent=1 // pred_fallthru
      _
    // Predicated region
    $region22: #{tpu_custom_call.1} parent=1 // pred_check
      _
    $region23: #{tpu_custom_call.1} parent=1 // pred_check_branch
      %234 = sbr.rel (0) target = $region25
    $region24: #{tpu_custom_call.1} parent=1 // pred_region
      %235 = dma.done [#allocation4], 128
    $region25: #{tpu_custom_call.1} parent=1 // pred_fallthru
      _
    %236 = vsyncpa [#allocation3], 1
    %237 = vsyncpa [#allocation4], 1

</llo_original>
